<compile_context>
chip_gen: v5e
topology: v5e:2x2
jax: 0.10.0
libtpu: 0.0.40
codegen_flags: <defaults>
</compile_context>

<pallas_src>
import functools

import jax
import jax.numpy as jnp
from jax import lax
from jax.experimental import pallas as pl
from jax.experimental.pallas import tpu as pltpu


def _conv_bn_act_kernel(x_ref, w_ref, scale_ref, shift_ref, o_ref, *,
                        kh, tile_h, n_row_tiles, activation):
    """One grid step computes tile_h output rows of one batch element.

    x_ref:     (1, Hp, Wp*Cin)           bf16  full padded image (resident per b)
    w_ref:     (KH, Wp*Cin, out_w*Cout)  bf16  banded weights (resident)
    scale_ref: (1, out_w*Cout)           f32   BN scale, tiled along out_w
    shift_ref: (1, out_w*Cout)           f32   BN shift (+ conv bias), tiled
    o_ref:     (1, tile_h, out_w*Cout)   bf16  lane-dense output tile
    """
    owc = o_ref.shape[-1]
    halo_h = tile_h + kh - 1

    if n_row_tiles == 1:
        row0 = 0                                           # static fast path
    else:
        row0 = pl.multiple_of(pl.program_id(1) * tile_h, tile_h)

    # Aligned row window (tile_h + KH - 1 rows) of the resident padded slab.
    window = x_ref[0, pl.ds(row0, halo_h), :]              # (halo_h, Wp*Cin) bf16

    # KH accumulated MXU dots against the banded weights (no concatenate,
    # no per-tap reshape); f32 accumulation.
    acc = jnp.zeros((tile_h, owc), jnp.float32)
    for i in range(kh):                                    # small, static, unrolled
        acc = acc + jnp.dot(window[i:i + tile_h, :], w_ref[i],
                            preferred_element_type=jnp.float32)

    # Fused BatchNorm (eval) + conv bias + activation, lane-wise in f32.
    y = acc * scale_ref[...] + shift_ref[...]
    if activation == "sigmoid":
        y = jax.nn.sigmoid(y)
    else:
        y = jnp.maximum(y, 0.0)

    o_ref[0] = y.astype(o_ref.dtype)                       # bf16 lane-dense store


def _pick_tile_h(out_h, hp, wpc, owc, kh, max_bytes=24 * 1024 * 1024):
    """Largest row tile that (a) divides out_h, (b) keeps the output block's
    second-to-last dim a multiple of 8 (or full), and (c) fits a VMEM budget
    that includes double buffers, the resident banded weights and the f32
    temporaries (safe for v7x's 64 MiB physical VMEM as well as v5e/v6e)."""
    def vmem_bytes(th):
        halo_h = th + kh - 1
        x_blk = 2 * hp * wpc * 2                  # double-buffered bf16 image block
        w_blk = 2 * kh * wpc * owc * 2            # banded weights (both buffers)
        ss_blk = 2 * 2 * owc * 4                  # scale + shift
        out_blk = 2 * th * owc * 2                # double-buffered bf16 output tile
        tmp = halo_h * wpc * 2                    # row window value
        tmp += kh * th * wpc * 2                  # shifted LHS slab copies
        tmp += 2 * th * owc * 4                   # f32 acc + activation value
        return x_blk + w_blk + ss_blk + out_blk + tmp

    cands = [d for d in range(1, out_h + 1)
             if out_h % d == 0 and (d % 8 == 0 or d == out_h)]
    for d in sorted(cands, reverse=True):
        if vmem_bytes(d) <= max_bytes:
            return d
    return min(cands)


def conv2d_block_forward(x_nchw, weight_oikk, bias, gamma, beta, running_mean,
                         running_var, *, stride=1, padding=1, eps=1e-5,
                         activation="relu", tile_h=None):
    """Conv2d + BatchNorm2d(eval) + activation.  Input/output are NCHW f32."""
    assert activation in ("relu", "sigmoid"), f"unsupported activation {activation!r}"
    assert stride == 1, "TODO(synk): stride > 1 needs a strided banded-weight build"
    n, cin, h, w = x_nchw.shape
    cout, cin_w, kh, kw = weight_oikk.shape
    assert cin == cin_w

    out_h = h + 2 * padding - kh + 1
    out_w = w + 2 * padding - kw + 1
    hp, wp = h + 2 * padding, w + 2 * padding
    wpc, owc = wp * cin, out_w * cout

    # NCHW -> NHWC, cast to bf16 BEFORE padding, flatten (W, Cin) into lanes.
    x_nhwc = jnp.transpose(x_nchw, (0, 2, 3, 1)).astype(jnp.bfloat16)
    x_pad = jnp.pad(x_nhwc, ((0, 0), (padding, padding), (padding, padding), (0, 0)))
    x_flat = x_pad.reshape(n, hp, wpc)

    # Banded ("shifted-Toeplitz") weights:
    #   wb[i, wp_i*Cin + c, w*Cout + co] = W[co, c, i, wp_i - w]  if 0 <= wp_i-w < KW
    w_hwio = jnp.transpose(weight_oikk, (2, 3, 1, 0))              # (KH, KW, Cin, Cout)
    j_idx = jnp.arange(wp)[:, None] - jnp.arange(out_w)[None, :]   # (Wp, out_w)
    valid = (j_idx >= 0) & (j_idx < kw)
    wb = w_hwio[:, jnp.clip(j_idx, 0, kw - 1)]                     # (KH, Wp, out_w, Cin, Cout)
    wb = jnp.where(valid[None, :, :, None, None], wb, 0.0)
    wb = jnp.transpose(wb, (0, 1, 3, 2, 4)).reshape(kh, wpc, owc).astype(jnp.bfloat16)

    # Fold conv bias + BatchNorm running stats into per-channel scale/shift,
    # pre-tiled along out_w to match the lane-dense output layout.
    scale = (gamma / jnp.sqrt(running_var + eps)).astype(jnp.float32)      # (Cout,)
    shift = ((bias - running_mean) * scale + beta).astype(jnp.float32)     # (Cout,)
    scale_t = jnp.tile(scale, out_w).reshape(1, owc)
    shift_t = jnp.tile(shift, out_w).reshape(1, owc)

    if tile_h is None:
        tile_h = _pick_tile_h(out_h, hp, wpc, owc, kh)
    assert out_h % tile_h == 0, "TODO(synk): ragged row tiles not implemented"
    assert tile_h % 8 == 0 or tile_h == out_h
    n_row_tiles = out_h // tile_h

    kernel = functools.partial(
        _conv_bn_act_kernel, kh=kh, tile_h=tile_h,
        n_row_tiles=n_row_tiles, activation=activation)

    out_flat = pl.pallas_call(
        kernel,
        out_shape=jax.ShapeDtypeStruct((n, out_h, owc), jnp.bfloat16),
        grid_spec=pltpu.PrefetchScalarGridSpec(
            num_scalar_prefetch=0,
            grid=(n, n_row_tiles),
            in_specs=[
                pl.BlockSpec((1, hp, wpc), lambda b, r: (b, 0, 0)),     # padded image
                pl.BlockSpec((kh, wpc, owc), lambda b, r: (0, 0, 0)),   # banded weights
                pl.BlockSpec((1, owc), lambda b, r: (0, 0)),            # scale
                pl.BlockSpec((1, owc), lambda b, r: (0, 0)),            # shift
            ],
            out_specs=pl.BlockSpec((1, tile_h, owc), lambda b, r: (b, r, 0)),
        ),
        compiler_params=pltpu.CompilerParams(
            dimension_semantics=("parallel", "parallel"),
            vmem_limit_bytes=32 * 1024 * 1024,
        ),
    )(x_flat, wb, scale_t, shift_t)

    # (N, out_h, out_w*Cout) -> NHWC -> NCHW f32 (PyTorch convention).
    out_nhwc = out_flat.reshape(n, out_h, out_w, cout)
    return jnp.transpose(out_nhwc, (0, 3, 1, 2)).astype(jnp.float32)


def _reference(x_nchw, weight_oikk, bias, gamma, beta, mean, var, *,
               padding, eps=1e-5, activation="relu"):
    y = lax.conv_general_dilated(
        x_nchw, weight_oikk, window_strides=(1, 1),
        padding=((padding, padding), (padding, padding)),
        dimension_numbers=("NCHW", "OIHW", "NCHW"))
    y = y + bias.reshape(1, -1, 1, 1)
    y = (y - mean.reshape(1, -1, 1, 1)) / jnp.sqrt(var.reshape(1, -1, 1, 1) + eps)
    y = y * gamma.reshape(1, -1, 1, 1) + beta.reshape(1, -1, 1, 1)
    if activation == "sigmoid":
        return jax.nn.sigmoid(y)
    return jnp.maximum(y, 0.0)


if __name__ == "__main__":
    # Shapes consistent with Conv2DBlock(in_channel=4, out_channel=8,
    # kernel_size=3, stride=1, padding=1).
    N, Cin, H, W = 2, 4, 16, 16
    Cout, K = 8, 3

    key = jax.random.PRNGKey(0)
    kx, kw_, kb, kg, kbeta, km, kv = jax.random.split(key, 7)

    x = jax.random.normal(kx, (N, Cin, H, W), dtype=jnp.float32)
    weight = 0.1 * jax.random.normal(kw_, (Cout, Cin, K, K), dtype=jnp.float32)
    bias = 0.1 * jax.random.normal(kb, (Cout,), dtype=jnp.float32)
    gamma = 1.0 + 0.1 * jax.random.normal(kg, (Cout,), dtype=jnp.float32)
    beta = 0.1 * jax.random.normal(kbeta, (Cout,), dtype=jnp.float32)
    running_mean = 0.1 * jax.random.normal(km, (Cout,), dtype=jnp.float32)
    running_var = 1.0 + 0.1 * jnp.abs(jax.random.normal(kv, (Cout,), dtype=jnp.float32))

    fwd = jax.jit(conv2d_block_forward,
                  static_argnames=("stride", "padding", "eps", "activation", "tile_h"))

    # ReLU path, explicit row tiling (tile_h=8 -> grid (2, 2), halo row window).
    out = fwd(x, weight, bias, gamma, beta, running_mean, running_var,
              stride=1, padding=1, activation="relu", tile_h=8)
    out = jax.block_until_ready(out)
    ref = _reference(x, weight, bias, gamma, beta, running_mean, running_var,
                     padding=1, activation="relu")
    assert out.shape == (N, Cout, H, W)
    assert jnp.allclose(out, ref, atol=2e-2, rtol=2e-2), "relu mismatch vs reference"

    # Sigmoid path, auto tile selection (whole image per grid step).
    out_s = fwd(x, weight, bias, gamma, beta, running_mean, running_var,
                stride=1, padding=1, activation="sigmoid", tile_h=None)
    out_s = jax.block_until_ready(out_s)
    ref_s = _reference(x, weight, bias, gamma, beta, running_mean, running_var,
                       padding=1, activation="sigmoid")
    assert jnp.allclose(out_s, ref_s, atol=2e-2, rtol=2e-2), "sigmoid mismatch vs reference"

    print("KERNEL_OK")
</pallas_src>

<mosaic_0001>
module attributes {stable_mosaic.version = 11 : i64} {
  func.func @_conv_bn_act_kernel(%arg0: i32, %arg1: i32, %arg2: memref<1x18x72xbf16, #tpu.memory_space<vmem>>, %arg3: memref<3x72x128xbf16, #tpu.memory_space<vmem>>, %arg4: memref<1x128xf32, #tpu.memory_space<vmem>>, %arg5: memref<1x128xf32, #tpu.memory_space<vmem>>, %arg6: memref<1x8x128xbf16, #tpu.memory_space<vmem>>) attributes {dimension_semantics = [#tpu.dimension_semantics<parallel>, #tpu.dimension_semantics<parallel>], iteration_bounds = array<i64: 2, 2>, scalar_prefetch = 0 : i64, scratch_operands = 0 : i64, tpu.core_type = #tpu.core_type<tc>, window_params = [{transform_indices = @transform_0, window_bounds = array<i64: 1, 18, 72>}, {pipeline_mode = #tpu.pipeline_mode<synchronous>, transform_indices = @transform_1, window_bounds = array<i64: 3, 72, 128>}, {pipeline_mode = #tpu.pipeline_mode<synchronous>, transform_indices = @transform_2, window_bounds = array<i64: 1, 128>}, {pipeline_mode = #tpu.pipeline_mode<synchronous>, transform_indices = @transform_3, window_bounds = array<i64: 1, 128>}, {transform_indices = @transform_4, window_bounds = array<i64: 1, 8, 128>}]} {
    %c8_i32 = arith.constant 8 : i32
    %0 = arith.muli %arg1, %c8_i32 : i32
    %1 = tpu.assume_multiple %0, 8 : i32
    %c0 = arith.constant 0 : index
    %2 = arith.index_cast %1 : i32 to index
    %c0_0 = arith.constant 0 : index
    %3 = vector.load %arg2[%c0, %2, %c0_0] : memref<1x18x72xbf16, #tpu.memory_space<vmem>>, vector<1x10x72xbf16>
    %4 = vector.shape_cast %3 : vector<1x10x72xbf16> to vector<10x72xbf16>
    %cst = arith.constant 0.000000e+00 : f32
    %5 = vector.broadcast %cst : f32 to vector<8x128xf32>
    %6 = vector.extract_strided_slice %4 {offsets = [0, 0], sizes = [8, 72], strides = [1, 1]} : vector<10x72xbf16> to vector<8x72xbf16>
    %c0_1 = arith.constant 0 : index
    %c0_2 = arith.constant 0 : index
    %c0_3 = arith.constant 0 : index
    %7 = vector.load %arg3[%c0_1, %c0_2, %c0_3] : memref<3x72x128xbf16, #tpu.memory_space<vmem>>, vector<1x72x128xbf16>
    %8 = vector.shape_cast %7 : vector<1x72x128xbf16> to vector<72x128xbf16>
    %cst_4 = arith.constant dense<0.000000e+00> : vector<8x128xf32>
    %9 = tpu.matmul %6, %8, %cst_4 {dimension_numbers = #tpu.dot_dimension_numbers<[1], [0], [0], [1], [0, 0, 1, 1], [], []>} : vector<8x72xbf16>, vector<72x128xbf16>, vector<8x128xf32> -> vector<8x128xf32>
    %10 = arith.addf %5, %9 : vector<8x128xf32>
    %11 = vector.extract_strided_slice %4 {offsets = [1, 0], sizes = [8, 72], strides = [1, 1]} : vector<10x72xbf16> to vector<8x72xbf16>
    %c1 = arith.constant 1 : index
    %c0_5 = arith.constant 0 : index
    %c0_6 = arith.constant 0 : index
    %12 = vector.load %arg3[%c1, %c0_5, %c0_6] : memref<3x72x128xbf16, #tpu.memory_space<vmem>>, vector<1x72x128xbf16>
    %13 = vector.shape_cast %12 : vector<1x72x128xbf16> to vector<72x128xbf16>
    %cst_7 = arith.constant dense<0.000000e+00> : vector<8x128xf32>
    %14 = tpu.matmul %11, %13, %cst_7 {dimension_numbers = #tpu.dot_dimension_numbers<[1], [0], [0], [1], [0, 0, 1, 1], [], []>} : vector<8x72xbf16>, vector<72x128xbf16>, vector<8x128xf32> -> vector<8x128xf32>
    %15 = arith.addf %10, %14 : vector<8x128xf32>
    %16 = vector.extract_strided_slice %4 {offsets = [2, 0], sizes = [8, 72], strides = [1, 1]} : vector<10x72xbf16> to vector<8x72xbf16>
    %c2 = arith.constant 2 : index
    %c0_8 = arith.constant 0 : index
    %c0_9 = arith.constant 0 : index
    %17 = vector.load %arg3[%c2, %c0_8, %c0_9] : memref<3x72x128xbf16, #tpu.memory_space<vmem>>, vector<1x72x128xbf16>
    %18 = vector.shape_cast %17 : vector<1x72x128xbf16> to vector<72x128xbf16>
    %cst_10 = arith.constant dense<0.000000e+00> : vector<8x128xf32>
    %19 = tpu.matmul %16, %18, %cst_10 {dimension_numbers = #tpu.dot_dimension_numbers<[1], [0], [0], [1], [0, 0, 1, 1], [], []>} : vector<8x72xbf16>, vector<72x128xbf16>, vector<8x128xf32> -> vector<8x128xf32>
    %20 = arith.addf %15, %19 : vector<8x128xf32>
    %c0_11 = arith.constant 0 : index
    %c0_12 = arith.constant 0 : index
    %21 = vector.load %arg4[%c0_11, %c0_12] : memref<1x128xf32, #tpu.memory_space<vmem>>, vector<1x128xf32>
    %22 = vector.broadcast %21 : vector<1x128xf32> to vector<8x128xf32>
    %23 = arith.mulf %20, %22 : vector<8x128xf32>
    %c0_13 = arith.constant 0 : index
    %c0_14 = arith.constant 0 : index
    %24 = vector.load %arg5[%c0_13, %c0_14] : memref<1x128xf32, #tpu.memory_space<vmem>>, vector<1x128xf32>
    %25 = vector.broadcast %24 : vector<1x128xf32> to vector<8x128xf32>
    %26 = arith.addf %23, %25 : vector<8x128xf32>
    %cst_15 = arith.constant 0.000000e+00 : f32
    %27 = vector.broadcast %cst_15 : f32 to vector<8x128xf32>
    %28 = arith.maximumf %26, %27 : vector<8x128xf32>
    %29 = arith.truncf %28 : vector<8x128xf32> to vector<8x128xbf16>
    %c0_16 = arith.constant 0 : index
    %c0_17 = arith.constant 0 : index
    %c0_18 = arith.constant 0 : index
    %30 = vector.load %arg6[%c0_16, %c0_17, %c0_18] : memref<1x8x128xbf16, #tpu.memory_space<vmem>>, vector<1x8x128xbf16>
    %31 = vector.shape_cast %30 : vector<1x8x128xbf16> to vector<8x128xbf16>
    %32 = vector.shape_cast %29 : vector<8x128xbf16> to vector<1x8x128xbf16>
    tpu.vector_store %arg6[%c0_16, %c0_17, %c0_18], %32 {strides = array<i32>} : memref<1x8x128xbf16, #tpu.memory_space<vmem>>, vector<1x8x128xbf16>,
    return
  }
  func.func @transform_0(%arg0: i32, %arg1: i32) -> (i32, i32, i32) {
    %c0_i32 = arith.constant 0 : i32
    %c0_i32_0 = arith.constant 0 : i32
    %c0_i32_1 = arith.constant 0 : i32
    return %arg0, %c0_i32, %c0_i32_0 : i32, i32, i32
  }
  func.func @transform_1(%arg0: i32, %arg1: i32) -> (i32, i32, i32) {
    %c0_i32 = arith.constant 0 : i32
    %c0_i32_0 = arith.constant 0 : i32
    %c0_i32_1 = arith.constant 0 : i32
    %c0_i32_2 = arith.constant 0 : i32
    return %c0_i32, %c0_i32_0, %c0_i32_1 : i32, i32, i32
  }
  func.func @transform_2(%arg0: i32, %arg1: i32) -> (i32, i32) {
    %c0_i32 = arith.constant 0 : i32
    %c0_i32_0 = arith.constant 0 : i32
    %c0_i32_1 = arith.constant 0 : i32
    return %c0_i32, %c0_i32_0 : i32, i32
  }
  func.func @transform_3(%arg0: i32, %arg1: i32) -> (i32, i32) {
    %c0_i32 = arith.constant 0 : i32
    %c0_i32_0 = arith.constant 0 : i32
    %c0_i32_1 = arith.constant 0 : i32
    return %c0_i32, %c0_i32_0 : i32, i32
  }
  func.func @transform_4(%arg0: i32, %arg1: i32) -> (i32, i32, i32) {
    %c0_i32 = arith.constant 0 : i32
    %c0_i32_0 = arith.constant 0 : i32
    return %arg0, %arg1, %c0_i32 : i32, i32, i32
  }
}

</mosaic_0001>

<llo_original>
// kernel: tile.13
$region0: #{tile.13}
  #allocation0 [shape = 's32[1]{0}', space=sflag, size = 0x4, scoped, tag = 'scoped memory for tile.13']
  %s0 = inlined_call_operand.vmem [shape: f32[8], index: 0, kind: input, shape index: {}]
  %s1 = inlined_call_operand.vmem [shape: f32[16,8], index: 1, kind: output, shape index: {}]
  // Predicated region
  $region2: #{tile.13} parent=0 // pred_check
    _
  $region3: #{tile.13} parent=0 // pred_check_branch
    %3 = sbr.rel (0) target = $region5
  $region4: #{tile.13} parent=0 // pred_region
    _
  $region5: #{tile.13} parent=0 // pred_fallthru
    _
  %v4 = vld [vmem:[%s0] ss:$0 sm:$0xff]
  %5 = vst [vmem:[%s1] sm:$0xff] %v4
  %s6 = scalar_lea.vmem %s1, 8
  %7 = vst [vmem:[%s6] sm:$0xff] %v4

// kernel: tile.14
$region0: #{tile.14}
  %s0 = inlined_call_operand.vmem [shape: f32[16,8], index: 0, kind: input, shape index: {}]
  %s1 = inlined_call_operand.vmem [shape: f32[1,128], index: 1, kind: output, shape index: {}]
  $region1: #{tile.14} parent=0
    #allocation0 [shape = 'u8[4096]{0}', space=vmem, size = 0x1000, scoped, tag = 'scoped mem for output reshape']
    %v2 = vld [vmem:[%s0] sm:$0x1]
    %vm3 = vcmask 64512
    %4 = vst.msk [vmem:[#allocation0] sm:$0x1] %vm3, %v2
    %s5 = scalar_lea.vmem %s0, 15
    %v6 = vld [vmem:[%s5] sm:$0x1]
    %7 = vrot.lane.b32.xlu0 %v6, 120
    %v8 = vpop.permute.xlu0 %7
    %vm9 = vcmask 1048512
    %10 = vst.msk [vmem:[#allocation0] sm:$0x1] %vm9, %v8
    %s11 = scalar_lea.vmem %s0, 14
    %v12 = vld [vmem:[%s11] sm:$0x1]
    %13 = vrot.lane.b32.xlu0 %v12, 112
    %v14 = vpop.permute.xlu0 %13
    %vm15 = vcmask 982912
    %16 = vst.msk [vmem:[#allocation0] sm:$0x1] %vm15, %v14
    %s17 = scalar_lea.vmem %s0, 13
    %v18 = vld [vmem:[%s17] sm:$0x1]
    %19 = vrot.lane.b32.xlu0 %v18, 104
    %v20 = vpop.permute.xlu0 %19
    %vm21 = vcmask 917312
    %22 = vst.msk [vmem:[#allocation0] sm:$0x1] %vm21, %v20
    %s23 = scalar_lea.vmem %s0, 12
    %v24 = vld [vmem:[%s23] sm:$0x1]
    %25 = vrot.lane.b32.xlu0 %v24, 96
    %v26 = vpop.permute.xlu0 %25
    %vm27 = vcmask 851712
    %28 = vst.msk [vmem:[#allocation0] sm:$0x1] %vm27, %v26
    %s29 = scalar_lea.vmem %s0, 11
    %v30 = vld [vmem:[%s29] sm:$0x1]
    %31 = vrot.lane.b32.xlu0 %v30, 88
    %v32 = vpop.permute.xlu0 %31
    %vm33 = vcmask 786112
    %34 = vst.msk [vmem:[#allocation0] sm:$0x1] %vm33, %v32
    %s35 = scalar_lea.vmem %s0, 10
    %v36 = vld [vmem:[%s35] sm:$0x1]
    %37 = vrot.lane.b32.xlu0 %v36, 80
    %v38 = vpop.permute.xlu0 %37
    %vm39 = vcmask 720512
    %40 = vst.msk [vmem:[#allocation0] sm:$0x1] %vm39, %v38
    %s41 = scalar_lea.vmem %s0, 9
    %v42 = vld [vmem:[%s41] sm:$0x1]
    %43 = vrot.lane.b32.xlu0 %v42, 72
    %v44 = vpop.permute.xlu0 %43
    %vm45 = vcmask 654912
    %46 = vst.msk [vmem:[#allocation0] sm:$0x1] %vm45, %v44
    %s47 = scalar_lea.vmem %s0, 8
    %v48 = vld [vmem:[%s47] sm:$0x1]
    %49 = vrot.lane.b32.xlu0 %v48, 64
    %v50 = vpop.permute.xlu0 %49
    %vm51 = vcmask 589312
    %52 = vst.msk [vmem:[#allocation0] sm:$0x1] %vm51, %v50
    %s53 = scalar_lea.vmem %s0, 7
    %v54 = vld [vmem:[%s53] sm:$0x1]
    %55 = vrot.lane.b32.xlu0 %v54, 56
    %v56 = vpop.permute.xlu0 %55
    %vm57 = vcmask 523712
    %58 = vst.msk [vmem:[#allocation0] sm:$0x1] %vm57, %v56
    %s59 = scalar_lea.vmem %s0, 6
    %v60 = vld [vmem:[%s59] sm:$0x1]
    %61 = vrot.lane.b32.xlu0 %v60, 48
    %v62 = vpop.permute.xlu0 %61
    %vm63 = vcmask 458112
    %64 = vst.msk [vmem:[#allocation0] sm:$0x1] %vm63, %v62
    %s65 = scalar_lea.vmem %s0, 5
    %v66 = vld [vmem:[%s65] sm:$0x1]
    %67 = vrot.lane.b32.xlu0 %v66, 40
    %v68 = vpop.permute.xlu0 %67
    %vm69 = vcmask 392512
    %70 = vst.msk [vmem:[#allocation0] sm:$0x1] %vm69, %v68
    %s71 = scalar_lea.vmem %s0, 4
    %v72 = vld [vmem:[%s71] sm:$0x1]
    %73 = vrot.lane.b32.xlu0 %v72, 32
    %v74 = vpop.permute.xlu0 %73
    %vm75 = vcmask 326912
    %76 = vst.msk [vmem:[#allocation0] sm:$0x1] %vm75, %v74
    %s77 = scalar_lea.vmem %s0, 3
    %v78 = vld [vmem:[%s77] sm:$0x1]
    %79 = vrot.lane.b32.xlu0 %v78, 24
    %v80 = vpop.permute.xlu0 %79
    %vm81 = vcmask 261312
    %82 = vst.msk [vmem:[#allocation0] sm:$0x1] %vm81, %v80
    %s83 = scalar_lea.vmem %s0, 2
    %v84 = vld [vmem:[%s83] sm:$0x1]
    %85 = vrot.lane.b32.xlu0 %v84, 16
    %v86 = vpop.permute.xlu0 %85
    %vm87 = vcmask 195712
    %88 = vst.msk [vmem:[#allocation0] sm:$0x1] %vm87, %v86
    %s89 = scalar_lea.vmem %s0, 1
    %v90 = vld [vmem:[%s89] sm:$0x1]
    %91 = vrot.lane.b32.xlu0 %v90, 8
    %v92 = vpop.permute.xlu0 %91
    %vm93 = vcmask 130112
    %94 = vst.msk [vmem:[#allocation0] sm:$0x1] %vm93, %v92
    %s96 = ssub.s32 2, 1
    %v97 = vld [vmem:[#allocation0] sm:%s96]
    %s99 = ssub.s32 2, 1
    %100 = vst [vmem:[%s1] sm:%s99] %v97

// kernel: conv2d_block_forward.1
$region0: #{conv2d_block_forward.1}
  #allocation0 [shape = 'u32[]', space=smem, size = 0x4, offset = 0x4, fixed_abs, tag = 'smem constant byte address 0x4 - core index']
  #allocation1 [shape = 'u32[72,128]{1,0:T(1,128)}', space=vmem, size = 0x9000, scoped, tag = 'internal scratch']
  %s0 = inlined_call_operand.vmem [shape: bf16[2,18,72], index: 0, kind: input, shape index: {}]
  %s1 = inlined_call_operand.vmem [shape: bf16[3,72,128], index: 1, kind: input, shape index: {}]
  %s2 = inlined_call_operand.vmem [shape: f32[1,128], index: 2, kind: input, shape index: {}]
  %s3 = inlined_call_operand.vmem [shape: f32[1,128], index: 3, kind: input, shape index: {}]
  %s4 = inlined_call_operand.vmem [shape: bf16[2,16,128], index: 4, kind: output, shape index: {}]
  %s5 = sld [smem:[#allocation0]]
  $region49: #{conv2d_block_forward.1} parent=0
    _
  %s7 = ssub.s32 1, %s5
  %s8 = scalar_select 0, %s7, %s5
  loop: start=0, step=1, limit=6
  $region2: #{conv2d_block_forward.1} parent=0 // loop_pre_header
    _
  $region3: #{conv2d_block_forward.1} parent=0 // loop_header
    %s10 = sphi 0, %s14
    %p11 = scmp.ge.s32.totalorder %s10, 6
    %s17 = sphi 0, %s29
    %s18 = sphi 0, %s25
    %s19 = sphi 0, %s17
    %s20 = sphi 0, %s18
    %s21 = sphi 0, %s19
    %s22 = sphi 0, %s20
    %s32 = sphi 0, %s34
    %s35 = sphi 0, %s32
    %s36 = sphi 0, %s35
    %s52 = sphi 0, %s36
    %s56 = sphi 0, %s56
    %s58 = sphi 0, %s56
    %s59 = sphi 0, %s58
    %s73 = sphi 0, %s59
    %s77 = sphi 0, %s77
    %s79 = sphi 0, %s77
    %s80 = sphi 0, %s79
    %s94 = sphi 0, %s80
    %s98 = sphi 0, %s98
    %s100 = sphi 0, %s98
    %s101 = sphi 0, %s100
    %s115 = sphi 0, %s101
    %s123 = sphi 0, %s125
    %s126 = sphi 0, %s123
    %s127 = sphi 0, %s126
    %s143 = sphi 0, %s127
  $region4: #{conv2d_block_forward.1} parent=0 // loop_header_branch
    %13 = sbr.rel (%p11) target = $region8
  $region5: #{conv2d_block_forward.1} parent=0 // loop_body
    %s15 = ssub.s32 %s10, 1
    %s16 = ssub.s32 %s10, 2
    %s23 = sadd.s32 1, %s18
    %p24 = scmp.ge.s32.totalorder %s23, 2
    %s25 = scalar_select %p24, 0, %s23
    %s26 = sadd.s32 1, %s17
    %s27 = scalar_select %p24, %s26, %s17
    %p28 = scmp.ge.s32.totalorder %s27, 2
    %s29 = scalar_select %p28, 0, %s27
    %s30 = ssub.s32 %s17, %s29
    %p31 = scmp.eq.s32.totalorder %s30, 0
    %s33 = sadd.s32 %s32, 1
    %s34 = scalar_select %p31, %s32, %s33
    %p37 = pneg %p31
    %p38 = scmp.eq.s32.totalorder %s10, 3
    %p39 = por %p37, %p38
    %p40 = scmp.ne.s32.totalorder %s32, %s35
    %p41 = scmp.eq.s32.totalorder %s10, 0
    %p42 = por %p40, %p41
    %p43 = scmp.ne.s32.totalorder %s32, %s35
    %p44 = scmp.eq.s32.totalorder %s15, 3
    %p45 = por %p43, %p44
    %p46 = scmp.ne.s32.totalorder %s35, %s36
    %p47 = scmp.eq.s32.totalorder %s15, 0
    %p48 = por %p46, %p47
    %p49 = scmp.ne.s32.totalorder %s35, %s36
    %p50 = scmp.eq.s32.totalorder %s16, 3
    %p51 = por %p49, %p50
    %p53 = scmp.ne.s32.totalorder %s36, %s52
    %p54 = scmp.eq.s32.totalorder %s16, 0
    %p55 = por %p53, %p54
    %s57 = sadd.s32 %s56, 1
    %p60 = scmp.eq.s32.totalorder %s10, 3
    %p61 = scmp.ne.s32.totalorder %s56, %s58
    %p62 = scmp.eq.s32.totalorder %s10, 0
    %p63 = por %p61, %p62
    %p64 = scmp.ne.s32.totalorder %s56, %s58
    %p65 = scmp.eq.s32.totalorder %s15, 3
    %p66 = por %p64, %p65
    %p67 = scmp.ne.s32.totalorder %s58, %s59
    %p68 = scmp.eq.s32.totalorder %s15, 0
    %p69 = por %p67, %p68
    %p70 = scmp.ne.s32.totalorder %s58, %s59
    %p71 = scmp.eq.s32.totalorder %s16, 3
    %p72 = por %p70, %p71
    %p74 = scmp.ne.s32.totalorder %s59, %s73
    %p75 = scmp.eq.s32.totalorder %s16, 0
    %p76 = por %p74, %p75
    %s78 = sadd.s32 %s77, 1
    %p81 = scmp.eq.s32.totalorder %s10, 3
    %p82 = scmp.ne.s32.totalorder %s77, %s79
    %p83 = scmp.eq.s32.totalorder %s10, 0
    %p84 = por %p82, %p83
    %p85 = scmp.ne.s32.totalorder %s77, %s79
    %p86 = scmp.eq.s32.totalorder %s15, 3
    %p87 = por %p85, %p86
    %p88 = scmp.ne.s32.totalorder %s79, %s80
    %p89 = scmp.eq.s32.totalorder %s15, 0
    %p90 = por %p88, %p89
    %p91 = scmp.ne.s32.totalorder %s79, %s80
    %p92 = scmp.eq.s32.totalorder %s16, 3
    %p93 = por %p91, %p92
    %p95 = scmp.ne.s32.totalorder %s80, %s94
    %p96 = scmp.eq.s32.totalorder %s16, 0
    %p97 = por %p95, %p96
    %s99 = sadd.s32 %s98, 1
    %p102 = scmp.eq.s32.totalorder %s10, 3
    %p103 = scmp.ne.s32.totalorder %s98, %s100
    %p104 = scmp.eq.s32.totalorder %s10, 0
    %p105 = por %p103, %p104
    %p106 = scmp.ne.s32.totalorder %s98, %s100
    %p107 = scmp.eq.s32.totalorder %s15, 3
    %p108 = por %p106, %p107
    %p109 = scmp.ne.s32.totalorder %s100, %s101
    %p110 = scmp.eq.s32.totalorder %s15, 0
    %p111 = por %p109, %p110
    %p112 = scmp.ne.s32.totalorder %s100, %s101
    %p113 = scmp.eq.s32.totalorder %s16, 3
    %p114 = por %p112, %p113
    %p116 = scmp.ne.s32.totalorder %s101, %s115
    %p117 = scmp.eq.s32.totalorder %s16, 0
    %p118 = por %p116, %p117
    %s119 = ssub.s32 %s17, %s29
    %s120 = ssub.s32 %s18, %s25
    %s121 = sor.u32 %s119, %s120
    %p122 = scmp.eq.s32.totalorder %s121, 0
    %s124 = sadd.s32 %s123, 1
    %s125 = scalar_select %p122, %s123, %s124
    %p128 = pneg %p122
    %p129 = scmp.eq.s32.totalorder %s10, 3
    %p130 = por %p128, %p129
    %p131 = scmp.ne.s32.totalorder %s123, %s126
    %p132 = scmp.eq.s32.totalorder %s10, 0
    %p133 = por %p131, %p132
    %p134 = scmp.ne.s32.totalorder %s123, %s126
    %p135 = scmp.eq.s32.totalorder %s15, 3
    %p136 = por %p134, %p135
    %p137 = scmp.ne.s32.totalorder %s126, %s127
    %p138 = scmp.eq.s32.totalorder %s15, 0
    %p139 = por %p137, %p138
    %p140 = scmp.ne.s32.totalorder %s126, %s127
    %p141 = scmp.eq.s32.totalorder %s16, 3
    %p142 = por %p140, %p141
    %p144 = scmp.ne.s32.totalorder %s127, %s143
    %p145 = scmp.eq.s32.totalorder %s16, 0
    %p146 = por %p144, %p145
    %p147 = scmp.le.s32.totalorder 1, %s10
    %p148 = scmp.lt.s32.totalorder %s10, 5
    %p149 = pnand %p147, %p148
    %p150 = pneg %p149
    // Predicated region
    $region9: #{conv2d_block_forward.1} parent=5 // pred_check
      _
    $region10: #{conv2d_block_forward.1} parent=5 // pred_check_branch
      %152 = sbr.rel (%p149) target = $region12
    $region11: #{conv2d_block_forward.1} parent=5 // pred_region
      %s153 = ssub.s32 %s10, 1
      // Predicated region
      $region13: #{conv2d_block_forward.1} parent=11 // pred_check
        %p154 = pneg %p69
      $region14: #{conv2d_block_forward.1} parent=11 // pred_check_branch
        %156 = sbr.rel (%p154) target = $region16
      $region15: #{conv2d_block_forward.1} parent=11 // pred_region
        _
      $region16: #{conv2d_block_forward.1} parent=11 // pred_fallthru
        _
      // Predicated region
      $region17: #{conv2d_block_forward.1} parent=11 // pred_check
        %p157 = pneg %p90
      $region18: #{conv2d_block_forward.1} parent=11 // pred_check_branch
        %159 = sbr.rel (%p157) target = $region20
      $region19: #{conv2d_block_forward.1} parent=11 // pred_region
        _
      $region20: #{conv2d_block_forward.1} parent=11 // pred_fallthru
        _
      // Predicated region
      $region21: #{conv2d_block_forward.1} parent=11 // pred_check
        %p160 = pneg %p111
      $region22: #{conv2d_block_forward.1} parent=11 // pred_check_branch
        %162 = sbr.rel (%p160) target = $region24
      $region23: #{conv2d_block_forward.1} parent=11 // pred_region
        _
      $region24: #{conv2d_block_forward.1} parent=11 // pred_fallthru
        _
    $region12: #{conv2d_block_forward.1} parent=5 // pred_fallthru
      _
    %p163 = scmp.lt.s32.totalorder %s10, 4
    // Predicated region
    $region25: #{conv2d_block_forward.1} parent=5 // pred_check
      %p164 = pneg %p163
    $region26: #{conv2d_block_forward.1} parent=5 // pred_check_branch
      %166 = sbr.rel (%p164) target = $region28
    $region27: #{conv2d_block_forward.1} parent=5 // pred_region
      // Predicated region
      $region29: #{conv2d_block_forward.1} parent=27 // pred_check
        %p167 = pneg %p42
      $region30: #{conv2d_block_forward.1} parent=27 // pred_check_branch
        %169 = sbr.rel (%p167) target = $region32
      $region31: #{conv2d_block_forward.1} parent=27 // pred_region
        %p170 = scmp.lt.s32.totalorder %s17, 1
        %s171 = scalar_select %p170, %s17, 1
        %s172 = smul.addr %s171, 3
        %s173 = smul.addr %s172, 4
        %s174 = scalar_lea.vmem %s0, %s173
      $region32: #{conv2d_block_forward.1} parent=27 // pred_fallthru
        _
    $region28: #{conv2d_block_forward.1} parent=5 // pred_fallthru
      _
    %p175 = scmp.le.s32.totalorder 1, %s10
    %p176 = scmp.lt.s32.totalorder %s10, 5
    %p177 = pnand %p175, %p176
    %p178 = pneg %p177
    // Predicated region
    $region33: #{conv2d_block_forward.1} parent=5 // pred_check
      _
    $region34: #{conv2d_block_forward.1} parent=5 // pred_check_branch
      %180 = sbr.rel (%p177) target = $region36
    $region35: #{conv2d_block_forward.1} parent=5 // pred_region
      %s181 = ssub.s32 %s10, 1
      %p182 = scmp.lt.s32.totalorder %s19, 1
      %s183 = scalar_select %p182, %s19, 1
      %s184 = smul.addr %s183, 3
      %s185 = smul.addr %s184, 4
      %s186 = scalar_lea.vmem %s0, %s185
      %p187 = pneg %p48
      %p188 = pneg %p45
      %p189 = pneg %p69
      %p190 = pneg %p66
      %p191 = pneg %p90
      %p192 = pneg %p87
      %p193 = pneg %p111
      %p194 = pneg %p108
      %p195 = pneg %p139
      %p196 = pneg %p136
      %p197 = scmp.lt.s32.totalorder %s19, 1
      %s198 = scalar_select %p197, %s19, 1
      %p199 = scmp.lt.s32.totalorder %s20, 1
      %s200 = scalar_select %p199, %s20, 1
      %s201 = smul.addr %s198, 2
      %s202 = sadd.s32 %s200, %s201
      %s203 = smul.addr %s202, 4
      %s204 = scalar_lea.vmem %s4, %s203
      %p205 = scmp.lt.s32.totalorder %s19, 1
      %s206 = scalar_select %p205, %s19, 1
      %s207 = smul.addr %s206, 3
      %s208 = smul.addr %s207, 4
      %s209 = scalar_lea.vmem %s0, %s208
      %p210 = scmp.lt.s32.totalorder %s19, 1
      %s211 = scalar_select %p210, %s19, 1
      %p212 = scmp.lt.s32.totalorder %s20, 1
      %s213 = scalar_select %p212, %s20, 1
      %s214 = smul.addr %s211, 2
      %s215 = sadd.s32 %s213, %s214
      %s216 = smul.addr %s215, 4
      %s217 = scalar_lea.vmem %s4, %s216
      %s219 = smul.u32 %s20, 8
      %s220 = sshra.s32 %s219, 3
      %s221 = sand.u32 %s219, 7
      %s222 = smul.addr %s220, 4
      %s223 = scalar_lea.vmem %s209, %s222
      %v224 = vld [vmem:[%s223] sm:$0xf]
      %v225 = vld [vmem:[%s223 + $0x4] sm:$0x1]
      %v226 = vld [vmem:[%s1] sm:$0xf]
      %v227 = vld [vmem:[%s1 + $0x4] sm:$0xf]
      %v228 = vld [vmem:[%s1 + $0x8] sm:$0xf]
      %v229 = vld [vmem:[%s1 + $0xc] sm:$0xf]
      %v230 = vld [vmem:[%s1 + $0x10] sm:$0xf]
      %v231 = vld [vmem:[%s1 + $0x14] sm:$0xf]
      %v232 = vld [vmem:[%s1 + $0x18] sm:$0xf]
      %v233 = vld [vmem:[%s1 + $0x1c] sm:$0xf]
      %v234 = vld [vmem:[%s1 + $0x20] sm:$0xf]
      %s235 = scalar_lea.vmem %s1, 36
      %v236 = vld [vmem:[%s235] sm:$0xf]
      %v237 = vld [vmem:[%s235 + $0x4] sm:$0xf]
      %v238 = vld [vmem:[%s235 + $0x8] sm:$0xf]
      %v239 = vld [vmem:[%s235 + $0xc] sm:$0xf]
      %v240 = vld [vmem:[%s235 + $0x10] sm:$0xf]
      %v241 = vld [vmem:[%s235 + $0x14] sm:$0xf]
      %v242 = vld [vmem:[%s235 + $0x18] sm:$0xf]
      %v243 = vld [vmem:[%s235 + $0x1c] sm:$0xf]
      %v244 = vld [vmem:[%s235 + $0x20] sm:$0xf]
      %v247 = vunpack.c.l.b16 %v224
      %v248 = vunpack.c.l.b16 %v225
      %v249 = vpack.c.b16 %v248, %v247
      %v251 = vshrl.u32 %v249, 16
      %v253 = vshll.u32 %v249, 16
      %v255 = vrot.slane %v253, 1
      %v256 = vor.u32 %v251, %v255
      %v266 = vunpack.c.l.b16 %v236
      %v267 = vunpack.c.l.b16 %v237
      %v268 = vunpack.c.l.b16 %v238
      %v269 = vunpack.c.l.b16 %v239
      %v270 = vunpack.c.l.b16 %v240
      %v271 = vunpack.c.l.b16 %v241
      %v272 = vunpack.c.l.b16 %v242
      %v273 = vunpack.c.l.b16 %v243
      %v274 = vunpack.c.l.b16 %v244
      %v275 = vpack.c.b16 %v267, %v266
      %v276 = vpack.c.b16 %v269, %v268
      %v277 = vpack.c.b16 %v271, %v270
      %v278 = vpack.c.b16 %v273, %v272
      %v279 = vpack.c.b16 %v274, %v274
      %vm284 = vcmask 588800
      %v286 = vsel %vm284, %v256, 0
      %vm288 = vcmask 1043456
      %v290 = vsel %vm288, %v279, 0
      %292 = vmatpush.bf16.msra.mxu0 0
      %293 = vmatpush.bf16.msra.mxu0 0
      %294 = vmatpush.bf16.msra.mxu0 0
      %295 = vmatpush.bf16.msra.mxu0 %v290
      %296 = vmatpush.bf16.msra.mxu0 %v278
      %297 = vmatpush.bf16.msra.mxu0 %v277
      %298 = vmatpush.bf16.msra.mxu0 %v276
      %299 = vmatpush.bf16.msra.mxu0 %v275
      %300 = vmatmul.bf16.gmra.mxu0 %v286
      %v301 = vpop.f32.mrf.mxu0
      %v302 = vadd.f32 0.0, %v301
      %v303 = vpop.f32.mrf.mxu0
      %304 = vdwg.mxu0
      %v314 = vunpack.c.l.b16 %v226
      %v315 = vunpack.c.l.b16 %v227
      %v316 = vunpack.c.l.b16 %v228
      %v317 = vunpack.c.l.b16 %v229
      %v318 = vunpack.c.l.b16 %v230
      %v319 = vunpack.c.l.b16 %v231
      %v320 = vunpack.c.l.b16 %v232
      %v321 = vunpack.c.l.b16 %v233
      %v322 = vunpack.c.l.b16 %v234
      %v323 = vpack.c.b16 %v315, %v314
      %v324 = vpack.c.b16 %v317, %v316
      %v325 = vpack.c.b16 %v319, %v318
      %v326 = vpack.c.b16 %v321, %v320
      %v327 = vpack.c.b16 %v322, %v322
      %v333 = vsel %vm284, %v224, 0
      %v336 = vsel %vm288, %v327, 0
      %338 = vmatpush.bf16.msra.mxu0 0
      %339 = vmatpush.bf16.msra.mxu0 0
      %340 = vmatpush.bf16.msra.mxu0 0
      %341 = vmatpush.bf16.msra.mxu0 %v336
      %342 = vmatpush.bf16.msra.mxu0 %v326
      %343 = vmatpush.bf16.msra.mxu0 %v325
      %344 = vmatpush.bf16.msra.mxu0 %v324
      %345 = vmatpush.bf16.msra.mxu0 %v323
      %346 = vmatmul.bf16.gmra.mxu0 %v333
      %v347 = vpop.f32.mrf.mxu0
      %v348 = vadd.f32 %v302, %v347
      %v349 = vpop.f32.mrf.mxu0
      %350 = vdwg.mxu0
      %s351 = scalar_lea.vmem %s1, 72
      %v352 = vld [vmem:[%s351] sm:$0xf]
      %v353 = vld [vmem:[%s351 + $0x4] sm:$0xf]
      %v354 = vld [vmem:[%s351 + $0x8] sm:$0xf]
      %v355 = vld [vmem:[%s351 + $0xc] sm:$0xf]
      %v356 = vld [vmem:[%s351 + $0x10] sm:$0xf]
      %v357 = vld [vmem:[%s351 + $0x14] sm:$0xf]
      %v358 = vld [vmem:[%s351 + $0x18] sm:$0xf]
      %v359 = vld [vmem:[%s351 + $0x1c] sm:$0xf]
      %v360 = vld [vmem:[%s351 + $0x20] sm:$0xf]
      %v361 = vrot.slane %v249, 1
      %v371 = vunpack.c.l.b16 %v352
      %v372 = vunpack.c.l.b16 %v353
      %v373 = vunpack.c.l.b16 %v354
      %v374 = vunpack.c.l.b16 %v355
      %v375 = vunpack.c.l.b16 %v356
      %v376 = vunpack.c.l.b16 %v357
      %v377 = vunpack.c.l.b16 %v358
      %v378 = vunpack.c.l.b16 %v359
      %v379 = vunpack.c.l.b16 %v360
      %v380 = vpack.c.b16 %v372, %v371
      %v381 = vpack.c.b16 %v374, %v373
      %v382 = vpack.c.b16 %v376, %v375
      %v383 = vpack.c.b16 %v378, %v377
      %v384 = vpack.c.b16 %v379, %v379
      %v390 = vsel %vm284, %v361, 0
      %v393 = vsel %vm288, %v384, 0
      %395 = vmatpush.bf16.msra.mxu0 0
      %396 = vmatpush.bf16.msra.mxu0 0
      %397 = vmatpush.bf16.msra.mxu0 0
      %398 = vmatpush.bf16.msra.mxu0 %v393
      %399 = vmatpush.bf16.msra.mxu0 %v383
      %400 = vmatpush.bf16.msra.mxu0 %v382
      %401 = vmatpush.bf16.msra.mxu0 %v381
      %402 = vmatpush.bf16.msra.mxu0 %v380
      %403 = vmatmul.bf16.gmra.mxu0 %v390
      %v404 = vpop.f32.mrf.mxu0
      %v405 = vadd.f32 0.0, %v404
      %v406 = vpop.f32.mrf.mxu0
      %407 = vdwg.mxu0
      %v408 = vadd.f32 %v348, %v405
      %v409 = vld [vmem:[%s2] sm:$0x1]
      %v411 = vperm.slane %v409, 0
      %v413 = vmul.f32 %v408, %v411
      %v414 = vld [vmem:[%s3] sm:$0x1]
      %v416 = vperm.slane %v414, 0
      %v418 = vadd.f32 %v413, %v416
      %v419 = vmax.f32 %v418, 0.0
      %v420 = vpack.c.bf16 %v419, %v419
      %421 = vst [vmem:[%s217] sm:$0xf] %v420
      %p422 = scmp.lt.s32.totalorder %s19, 1
      %s423 = scalar_select %p422, %s19, 1
      %p424 = scmp.lt.s32.totalorder %s20, 1
      %s425 = scalar_select %p424, %s20, 1
      %s426 = smul.addr %s423, 2
      %s427 = sadd.s32 %s425, %s426
      %s428 = smul.addr %s427, 4
      %s429 = scalar_lea.vmem %s4, %s428
      // Predicated region
      $region37: #{conv2d_block_forward.1} parent=35 // pred_check
        %p430 = pneg %p136
      $region38: #{conv2d_block_forward.1} parent=35 // pred_check_branch
        %432 = sbr.rel (%p430) target = $region40
      $region39: #{conv2d_block_forward.1} parent=35 // pred_region
        _
      $region40: #{conv2d_block_forward.1} parent=35 // pred_fallthru
        _
    $region36: #{conv2d_block_forward.1} parent=5 // pred_fallthru
      _
    %p433 = scmp.le.s32.totalorder 2, %s10
    // Predicated region
    $region41: #{conv2d_block_forward.1} parent=5 // pred_check
      %p434 = pneg %p433
    $region42: #{conv2d_block_forward.1} parent=5 // pred_check_branch
      %436 = sbr.rel (%p434) target = $region44
    $region43: #{conv2d_block_forward.1} parent=5 // pred_region
      %s437 = ssub.s32 %s10, 2
      // Predicated region
      $region45: #{conv2d_block_forward.1} parent=43 // pred_check
        %p438 = pneg %p142
      $region46: #{conv2d_block_forward.1} parent=43 // pred_check_branch
        %440 = sbr.rel (%p438) target = $region48
      $region47: #{conv2d_block_forward.1} parent=43 // pred_region
        %p441 = scmp.lt.s32.totalorder %s21, 1
        %s442 = scalar_select %p441, %s21, 1
        %p443 = scmp.lt.s32.totalorder %s22, 1
        %s444 = scalar_select %p443, %s22, 1
        %s445 = smul.addr %s442, 2
        %s446 = sadd.s32 %s444, %s445
        %s447 = smul.addr %s446, 4
        %s448 = scalar_lea.vmem %s4, %s447
      $region48: #{conv2d_block_forward.1} parent=43 // pred_fallthru
        _
    $region44: #{conv2d_block_forward.1} parent=5 // pred_fallthru
      _
  $region6: #{conv2d_block_forward.1} parent=0 // loop_footer
    %s14 = sadd.s32 1, %s10
  $region7: #{conv2d_block_forward.1} parent=0 // loop_footer_branch
    %9 = sbr.rel target = $region3
  $region8: #{conv2d_block_forward.1} parent=0 // loop_exit
    _

</llo_original>
